<compile_context>
chip_gen: v5e
topology: v5e:2x2
jax: 0.10.0
libtpu: 0.0.40
codegen_flags: <defaults>
</compile_context>

<pallas_src>
import jax
import jax.numpy as jnp
from jax import lax
from jax.experimental import pallas as pl
from jax.experimental.pallas import tpu as pltpu


def _round_up(a: int, b: int) -> int:
    return (a + b - 1) // b * b


def linear_wn_kernel(scale_ref, x_ref, v_ref, b_ref, o_ref, acc_ref):
    # scale_ref: (1,)     f32 in SMEM  -- g / ||v||_F   (scalar prefetch)
    # x_ref:     (tm, tk) activations tile
    # v_ref:     (tn, tk) weight tile in PyTorch (out, in) layout
    # b_ref:     (1, tn)  f32 bias tile
    # o_ref:     (tm, tn) output tile
    # acc_ref:   (tm, tn) f32 VMEM accumulator (resident across the K axis)
    k = pl.program_id(2)

    @pl.when(k == 0)
    def _init():
        acc_ref[...] = jnp.zeros_like(acc_ref)

    # (tm,tk) x (tn,tk) contracted on tk  ==  x @ v^T, without materializing v^T.
    acc_ref[...] += lax.dot_general(
        x_ref[...], v_ref[...],
        dimension_numbers=(((1,), (1,)), ((), ())),
        preferred_element_type=jnp.float32,
    )

    @pl.when(k == pl.num_programs(2) - 1)
    def _epilogue():
        s = scale_ref[0]
        o_ref[...] = (acc_ref[...] * s + b_ref[...]).astype(o_ref.dtype)


def linear_transform(x, v, g, b, *, tm_max=256, tn_max=512, tk_max=512):
    """Forward of weight_norm(nn.Linear(in_dim, out_dim), dim=None).

    x: (..., in_dim)  v: (out_dim, in_dim)  g: scalar  b: (out_dim,)
    returns (..., out_dim)
    """
    out_dim, in_dim = v.shape
    orig_lead = x.shape[:-1]
    x2d = x.reshape(-1, in_dim)
    M, K, N = x2d.shape[0], in_dim, out_dim

    # weight-norm scalar scale = g / ||v||_F  (tiny f32 glue, computed once)
    norm = jnp.sqrt(jnp.sum(jnp.square(v.astype(jnp.float32))))
    scale = (g.astype(jnp.float32) / norm).reshape(1)

    # Tile sizes: lane-dense N/K (multiples of 128), sublane-aligned M (multiple of 8).
    # Defaults (<=256/512/512) keep the double-buffered footprint well under the
    # scoped-VMEM limit on v5e/v6e and under v7x's 64 MiB per TC.
    tm = min(tm_max, _round_up(M, 8))
    tn = min(tn_max, _round_up(N, 128))
    tk = min(tk_max, _round_up(K, 128))
    M_pad = _round_up(M, tm)
    N_pad = _round_up(N, tn)
    K_pad = _round_up(K, tk)

    # Compute dtype follows x (bf16 inputs -> bf16 MXU path with f32 accumulate).
    compute_dtype = x.dtype
    x_p = x2d.astype(compute_dtype)
    v_p = v.astype(compute_dtype)          # stays in (out_dim, in_dim) layout
    if (M_pad, K_pad) != (M, K):
        x_p = jnp.pad(x_p, ((0, M_pad - M), (0, K_pad - K)))
    if (N_pad, K_pad) != (N, K):
        v_p = jnp.pad(v_p, ((0, N_pad - N), (0, K_pad - K)))
    b_p = b.astype(jnp.float32).reshape(1, N)
    if N_pad != N:
        b_p = jnp.pad(b_p, ((0, 0), (0, N_pad - N)))

    grid = (M_pad // tm, N_pad // tn, K_pad // tk)

    itemsize = jnp.dtype(compute_dtype).itemsize
    cost = pl.CostEstimate(
        flops=2 * M_pad * N_pad * K_pad,
        transcendentals=0,
        bytes_accessed=(M_pad * K_pad + N_pad * K_pad + M_pad * N_pad) * itemsize,
    )

    out = pl.pallas_call(
        linear_wn_kernel,
        out_shape=jax.ShapeDtypeStruct((M_pad, N_pad), x.dtype),
        grid_spec=pltpu.PrefetchScalarGridSpec(
            num_scalar_prefetch=1,                    # scale -> SMEM
            grid=grid,
            in_specs=[
                pl.BlockSpec((tm, tk), lambda i, j, k, s: (i, k)),  # x
                pl.BlockSpec((tn, tk), lambda i, j, k, s: (j, k)),  # v (out, in)
                pl.BlockSpec((1, tn), lambda i, j, k, s: (0, j)),   # bias
            ],
            out_specs=pl.BlockSpec((tm, tn), lambda i, j, k, s: (i, j)),
            scratch_shapes=[pltpu.VMEM((tm, tn), jnp.float32)],
        ),
        compiler_params=pltpu.CompilerParams(
            dimension_semantics=("parallel", "parallel", "arbitrary")),
        cost_estimate=cost,
    )(scale, x_p, v_p, b_p)

    out = out[:M, :N]                      # drop lane padding of the output
    return out.reshape(orig_lead + (N,))


if __name__ == "__main__":
    in_dim, out_dim = 32, 64
    batch, seq = 2, 8

    key = jax.random.PRNGKey(0)
    kx, kv, kg, kb = jax.random.split(key, 4)

    x = jax.random.normal(kx, (batch, seq, in_dim), dtype=jnp.float32)
    v = jax.random.normal(kv, (out_dim, in_dim), dtype=jnp.float32) * 0.1
    g = jax.random.normal(kg, ()) * 0.5 + 1.0          # scalar g (weight_norm dim=None)
    b = jax.random.normal(kb, (out_dim,), dtype=jnp.float32) * 0.1

    y = linear_transform(x, v, g, b)
    y = jax.block_until_ready(y)

    # reference in plain JAX
    w_eff = g * v / jnp.sqrt(jnp.sum(jnp.square(v)))
    y_ref = x @ w_eff.T + b
    assert y.shape == (batch, seq, out_dim)
    assert jnp.allclose(y, y_ref, atol=1e-5, rtol=1e-5)

    print("KERNEL_OK")
</pallas_src>

<mosaic_0001>
module attributes {stable_mosaic.version = 11 : i64} {
  func.func @linear_wn_kernel(%arg0: i32, %arg1: i32, %arg2: i32, %arg3: memref<1xf32, #tpu.memory_space<smem>>, %arg4: memref<16x128xf32, #tpu.memory_space<vmem>>, %arg5: memref<128x128xf32, #tpu.memory_space<vmem>>, %arg6: memref<1x128xf32, #tpu.memory_space<vmem>>, %arg7: memref<16x128xf32, #tpu.memory_space<vmem>>, %arg8: memref<16x128xf32, #tpu.memory_space<vmem>>) attributes {dimension_semantics = [#tpu.dimension_semantics<parallel>, #tpu.dimension_semantics<parallel>, #tpu.dimension_semantics<arbitrary>], iteration_bounds = array<i64: 1, 1, 1>, scalar_prefetch = 1 : i64, scratch_operands = 1 : i64, tpu.core_type = #tpu.core_type<tc>, window_params = [{transform_indices = @transform_0, window_bounds = array<i64: 16, 128>}, {transform_indices = @transform_1, window_bounds = array<i64: 128, 128>}, {transform_indices = @transform_2, window_bounds = array<i64: 1, 128>}, {transform_indices = @transform_3, window_bounds = array<i64: 16, 128>}]} {
    %c0_i32 = arith.constant 0 : i32
    %0 = arith.cmpi eq, %arg2, %c0_i32 : i32
    %1 = arith.extui %0 : i1 to i32
    %c0_i32_0 = arith.constant 0 : i32
    %2 = arith.cmpi ne, %1, %c0_i32_0 : i32
    scf.if %2 {
      %cst_10 = arith.constant 0.000000e+00 : f32
      %12 = vector.broadcast %cst_10 : f32 to vector<16x128xf32>
      %c0_11 = arith.constant 0 : index
      %c0_12 = arith.constant 0 : index
      %13 = vector.load %arg8[%c0_11, %c0_12] : memref<16x128xf32, #tpu.memory_space<vmem>>, vector<16x128xf32>
      tpu.vector_store %arg8[%c0_11, %c0_12], %12 {strides = array<i32>} : memref<16x128xf32, #tpu.memory_space<vmem>>, vector<16x128xf32>,
    } else {
    }
    %c0 = arith.constant 0 : index
    %c0_1 = arith.constant 0 : index
    %3 = vector.load %arg8[%c0, %c0_1] : memref<16x128xf32, #tpu.memory_space<vmem>>, vector<16x128xf32>
    %c0_2 = arith.constant 0 : index
    %c0_3 = arith.constant 0 : index
    %4 = vector.load %arg4[%c0_2, %c0_3] : memref<16x128xf32, #tpu.memory_space<vmem>>, vector<16x128xf32>
    %c0_4 = arith.constant 0 : index
    %c0_5 = arith.constant 0 : index
    %5 = vector.load %arg5[%c0_4, %c0_5] : memref<128x128xf32, #tpu.memory_space<vmem>>, vector<128x128xf32>
    %cst = arith.constant dense<0.000000e+00> : vector<16x128xf32>
    %6 = tpu.matmul %4, %5, %cst {dimension_numbers = #tpu.dot_dimension_numbers<[1], [1], [0], [0], [0, 0, 1, 0], [], []>} : vector<16x128xf32>, vector<128x128xf32>, vector<16x128xf32> -> vector<16x128xf32>
    %7 = arith.addf %3, %6 : vector<16x128xf32>
    %c0_6 = arith.constant 0 : index
    %c0_7 = arith.constant 0 : index
    %8 = vector.load %arg8[%c0_6, %c0_7] : memref<16x128xf32, #tpu.memory_space<vmem>>, vector<16x128xf32>
    tpu.vector_store %arg8[%c0_6, %c0_7], %7 {strides = array<i32>} : memref<16x128xf32, #tpu.memory_space<vmem>>, vector<16x128xf32>,
    %c0_i32_8 = arith.constant 0 : i32
    %9 = arith.cmpi eq, %arg2, %c0_i32_8 : i32
    %10 = arith.extui %9 : i1 to i32
    %c0_i32_9 = arith.constant 0 : i32
    %11 = arith.cmpi ne, %10, %c0_i32_9 : i32
    scf.if %11 {
      %c0_10 = arith.constant 0 : index
      %12 = memref.load %arg3[%c0_10] : memref<1xf32, #tpu.memory_space<smem>>
      %c0_11 = arith.constant 0 : index
      %c0_12 = arith.constant 0 : index
      %13 = vector.load %arg8[%c0_11, %c0_12] : memref<16x128xf32, #tpu.memory_space<vmem>>, vector<16x128xf32>
      %14 = vector.broadcast %12 : f32 to vector<16x128xf32>
      %15 = arith.mulf %13, %14 : vector<16x128xf32>
      %c0_13 = arith.constant 0 : index
      %c0_14 = arith.constant 0 : index
      %16 = vector.load %arg6[%c0_13, %c0_14] : memref<1x128xf32, #tpu.memory_space<vmem>>, vector<1x128xf32>
      %17 = vector.broadcast %16 : vector<1x128xf32> to vector<16x128xf32>
      %18 = arith.addf %15, %17 : vector<16x128xf32>
      %c0_15 = arith.constant 0 : index
      %c0_16 = arith.constant 0 : index
      %19 = vector.load %arg7[%c0_15, %c0_16] : memref<16x128xf32, #tpu.memory_space<vmem>>, vector<16x128xf32>
      tpu.vector_store %arg7[%c0_15, %c0_16], %18 {strides = array<i32>} : memref<16x128xf32, #tpu.memory_space<vmem>>, vector<16x128xf32>,
    } else {
    }
    return
  }
  func.func @transform_0(%arg0: i32, %arg1: i32, %arg2: i32, %arg3: memref<1xf32, #tpu.memory_space<smem>>) -> (i32, i32) {
    %c0_i32 = arith.constant 0 : i32
    return %arg0, %arg2 : i32, i32
  }
  func.func @transform_1(%arg0: i32, %arg1: i32, %arg2: i32, %arg3: memref<1xf32, #tpu.memory_space<smem>>) -> (i32, i32) {
    %c0_i32 = arith.constant 0 : i32
    return %arg1, %arg2 : i32, i32
  }
  func.func @transform_2(%arg0: i32, %arg1: i32, %arg2: i32, %arg3: memref<1xf32, #tpu.memory_space<smem>>) -> (i32, i32) {
    %c0_i32 = arith.constant 0 : i32
    %c0_i32_0 = arith.constant 0 : i32
    return %c0_i32, %arg1 : i32, i32
  }
  func.func @transform_3(%arg0: i32, %arg1: i32, %arg2: i32, %arg3: memref<1xf32, #tpu.memory_space<smem>>) -> (i32, i32) {
    %c0_i32 = arith.constant 0 : i32
    return %arg0, %arg1 : i32, i32
  }
}

</mosaic_0001>

<llo_original>
// kernel: tpu_custom_call.1
$region0: #{tpu_custom_call.1}
  #allocation0 [shape = 'u32[]', space=smem, size = 0x4, offset = 0x4, fixed_abs, tag = 'smem constant byte address 0x4 - core index']
  #allocation1 [shape = 'u32[72,128]{1,0:T(1,128)}', space=vmem, size = 0x9000, scoped, tag = 'internal scratch']
  #allocation2 [shape = 'f32[16,128]{1,0:T(8,128)}', space=vmem, size = 0x2000, scoped, tag = 'scratch operand']
  #allocation3 [shape = 's32[1]{0}', space=sflag, size = 0x4, scoped, tag = 'scoped memory for tpu_custom_call.1']
  #allocation4 [shape = 'f32[1]{0:T(128)S(6)}', space=smem, size = 0x200, scoped, tag = 'prefetched SMEM operand 0']
  %s0 = inlined_call_operand.<no memory space> [shape: f32[1], index: 0, kind: input, shape index: {}]
  %s1 = inlined_call_operand.hbm [shape: f32[16,128], index: 1, kind: input, shape index: {}]
  %s2 = inlined_call_operand.hbm [shape: f32[128,128], index: 2, kind: input, shape index: {}]
  %s3 = inlined_call_operand.vmem [shape: f32[1,128], index: 3, kind: input, shape index: {}]
  %s4 = inlined_call_operand.hbm [shape: f32[16,128], index: 4, kind: output, shape index: {}]
  %s5 = sld [smem:[#allocation0]]
  $region38: #{tpu_custom_call.1} parent=0
    _
  %s7 = ssub.s32 1, %s5
  %s8 = scalar_select 0, %s7, %s5
  %9 = sst [smem:[#allocation4]] %s0
  $region1: #{tpu_custom_call.1} parent=0
    #allocation5 [shape = 'u8[8192]{0}', space=vmem, size = 0x2000, scoped, tag = 'input window, operand 1, single buffered']
    #allocation6 [shape = 's32[1]{0}', space=sflag, size = 0x4, scoped, tag = 'scoped memory for tpu_custom_call.1']
    #allocation7 [shape = 's32[1]{0}', space=sflag, size = 0x4, scoped, tag = 'scoped memory for tpu_custom_call.1']
    #allocation8 [shape = 'u8[65536]{0}', space=vmem, size = 0x10000, scoped, tag = 'input window, operand 2, single buffered']
    #allocation9 [shape = 's32[1]{0}', space=sflag, size = 0x4, scoped, tag = 'scoped memory for tpu_custom_call.1']
    #allocation10 [shape = 'u8[8192]{0}', space=vmem, size = 0x2000, scoped, tag = 'output window, operand 0, single buffered']
    %10 = vsyncpa [#allocation6], 0
    %11 = vsyncpa [#allocation9], 0
    %12 = vsyncpa [#allocation7], 0
    // Predicated region
    $region2: #{tpu_custom_call.1} parent=1 // pred_check
      _
    $region3: #{tpu_custom_call.1} parent=1 // pred_check_branch
      %14 = sbr.rel (0) target = $region5
    $region4: #{tpu_custom_call.1} parent=1 // pred_region
      %16 = vsyncadd [#allocation6], 0
      %s17 = sshll.u32 %s1, 4
      %s18 = int_to_ptr.hbm [resolvable:$true] %s17
      %s19 = sshll.u32 [#allocation5], 4
      %s20 = int_to_ptr.vmem [resolvable:$true] %s19
      %25 = dma.hbm_to_vmem [thread:$0]  %s18, 256, %s20, [#allocation6], 128, 128, 8
    $region5: #{tpu_custom_call.1} parent=1 // pred_fallthru
      _
    // Predicated region
    $region6: #{tpu_custom_call.1} parent=1 // pred_check
      _
    $region7: #{tpu_custom_call.1} parent=1 // pred_check_branch
      %27 = sbr.rel (0) target = $region9
    $region8: #{tpu_custom_call.1} parent=1 // pred_region
      %29 = vsyncadd [#allocation9], 0
      %s30 = sshll.u32 %s2, 4
      %s31 = int_to_ptr.hbm [resolvable:$true] %s30
      %s32 = sshll.u32 [#allocation8], 4
      %s33 = int_to_ptr.vmem [resolvable:$true] %s32
      %38 = dma.hbm_to_vmem [thread:$0]  %s31, 2048, %s33, [#allocation9], 128, 128, 8
    $region9: #{tpu_custom_call.1} parent=1 // pred_fallthru
      _
    // Predicated region
    $region10: #{tpu_custom_call.1} parent=1 // pred_check
      _
    $region11: #{tpu_custom_call.1} parent=1 // pred_check_branch
      %40 = sbr.rel (0) target = $region13
    $region12: #{tpu_custom_call.1} parent=1 // pred_region
      _
    $region13: #{tpu_custom_call.1} parent=1 // pred_fallthru
      _
    // Predicated region
    $region14: #{tpu_custom_call.1} parent=1 // pred_check
      _
    $region15: #{tpu_custom_call.1} parent=1 // pred_check_branch
      %42 = sbr.rel (0) target = $region17
    $region16: #{tpu_custom_call.1} parent=1 // pred_region
      %44 = dma.done [#allocation6], 256
    $region17: #{tpu_custom_call.1} parent=1 // pred_fallthru
      _
    // Predicated region
    $region18: #{tpu_custom_call.1} parent=1 // pred_check
      _
    $region19: #{tpu_custom_call.1} parent=1 // pred_check_branch
      %46 = sbr.rel (0) target = $region21
    $region20: #{tpu_custom_call.1} parent=1 // pred_region
      %48 = dma.done [#allocation9], 2048
    $region21: #{tpu_custom_call.1} parent=1 // pred_fallthru
      _
    %p49 = scmp.eq.s32.totalorder 0, 0
    // Predicated region
    $region22: #{tpu_custom_call.1} parent=1 // pred_check
      %p50 = pneg %p49
    $region23: #{tpu_custom_call.1} parent=1 // pred_check_branch
      %52 = sbr.rel (%p50) target = $region25
    $region24: #{tpu_custom_call.1} parent=1 // pred_region
      %53 = vst [vmem:[#allocation2] sm:$0xff] 0.0
      %54 = vst [vmem:[#allocation2 + $0x8] sm:$0xff] 0.0
    $region25: #{tpu_custom_call.1} parent=1 // pred_fallthru
      _
    %v55 = vld [vmem:[#allocation2] sm:$0xff]
    %v56 = vld [vmem:[#allocation2 + $0x8] sm:$0xff]
    %v57 = vld [vmem:[#allocation5] sm:$0xff]
    %v58 = vld [vmem:[#allocation5 + $0x8] sm:$0xff]
    %v59 = vld [vmem:[#allocation8] sm:$0xff]
    %v60 = vld [vmem:[#allocation8 + $0x8] sm:$0xff]
    %v61 = vld [vmem:[#allocation8 + $0x10] sm:$0xff]
    %v62 = vld [vmem:[#allocation8 + $0x18] sm:$0xff]
    %v63 = vld [vmem:[#allocation8 + $0x20] sm:$0xff]
    %v64 = vld [vmem:[#allocation8 + $0x28] sm:$0xff]
    %v65 = vld [vmem:[#allocation8 + $0x30] sm:$0xff]
    %v66 = vld [vmem:[#allocation8 + $0x38] sm:$0xff]
    %v67 = vld [vmem:[#allocation8 + $0x40] sm:$0xff]
    %v68 = vld [vmem:[#allocation8 + $0x48] sm:$0xff]
    %v69 = vld [vmem:[#allocation8 + $0x50] sm:$0xff]
    %v70 = vld [vmem:[#allocation8 + $0x58] sm:$0xff]
    %v71 = vld [vmem:[#allocation8 + $0x60] sm:$0xff]
    %v72 = vld [vmem:[#allocation8 + $0x68] sm:$0xff]
    %v73 = vld [vmem:[#allocation8 + $0x70] sm:$0xff]
    %v74 = vld [vmem:[#allocation8 + $0x78] sm:$0xff]
    %75 = vmatpush.xpose.msra.mxu0 %v74
    %76 = vmatpush.xpose.msra.mxu0 %v73
    %77 = vmatpush.xpose.msra.mxu0 %v72
    %78 = vmatpush.xpose.msra.mxu0 %v71
    %79 = vmatpush.xpose.msra.mxu0 %v70
    %80 = vmatpush.xpose.msra.mxu0 %v69
    %81 = vmatpush.xpose.msra.mxu0 %v68
    %82 = vmatpush.xpose.msra.mxu0 %v67
    %83 = vmatpush.xpose.msra.mxu0 %v66
    %84 = vmatpush.xpose.msra.mxu0 %v65
    %85 = vmatpush.xpose.msra.mxu0 %v64
    %86 = vmatpush.xpose.msra.mxu0 %v63
    %87 = vmatpush.xpose.msra.mxu0 %v62
    %88 = vmatpush.xpose.msra.mxu0 %v61
    %89 = vmatpush.xpose.msra.mxu0 %v60
    %90 = vmatpush.xpose.msra.mxu0 %v59
    %91 = vmatmul.f32.gmra.mxu0 %v57
    %v92 = vpop.f32.mrf.mxu0
    %v93 = vadd.f32 0.0, %v92
    %94 = vmatmul.f32.gmra.mxu0 %v58
    %v95 = vpop.f32.mrf.mxu0
    %v96 = vadd.f32 0.0, %v95
    %97 = vdwg.mxu0
    %v98 = vadd.f32 %v55, %v93
    %v99 = vadd.f32 %v56, %v96
    %100 = vst [vmem:[#allocation2] sm:$0xff] %v98
    %101 = vst [vmem:[#allocation2 + $0x8] sm:$0xff] %v99
    // Predicated region
    $region26: #{tpu_custom_call.1} parent=1 // pred_check
      %p102 = pneg %p49
    $region27: #{tpu_custom_call.1} parent=1 // pred_check_branch
      %104 = sbr.rel (%p102) target = $region29
    $region28: #{tpu_custom_call.1} parent=1 // pred_region
      %s105 = sld [smem:[#allocation4]]
      %v106 = vld [vmem:[#allocation2] sm:$0xff]
      %v107 = vld [vmem:[#allocation2 + $0x8] sm:$0xff]
      %v108 = vstv %s105
      %v109 = vmul.f32 %v106, %v108
      %v110 = vmul.f32 %v107, %v108
      %v111 = vld [vmem:[%s3] sm:$0x1]
      %v113 = vperm.slane %v111, 0
      %v115 = vadd.f32 %v109, %v113
      %v116 = vadd.f32 %v110, %v113
      %117 = vst [vmem:[#allocation10] sm:$0xff] %v115
      %118 = vst [vmem:[#allocation10 + $0x8] sm:$0xff] %v116
    $region29: #{tpu_custom_call.1} parent=1 // pred_fallthru
      _
    // Predicated region
    $region30: #{tpu_custom_call.1} parent=1 // pred_check
      _
    $region31: #{tpu_custom_call.1} parent=1 // pred_check_branch
      %120 = sbr.rel (0) target = $region33
    $region32: #{tpu_custom_call.1} parent=1 // pred_region
      %122 = vsyncadd [#allocation7], 0
      %s123 = sshll.u32 [#allocation10], 4
      %s124 = int_to_ptr.vmem [resolvable:$true] %s123
      %s125 = sshll.u32 %s4, 4
      %s126 = int_to_ptr.hbm [resolvable:$true] %s125
      %131 = dma.vmem_to_hbm [thread:$0]  %s124, 256, %s126, [#allocation7], 128, 128, 8
    $region33: #{tpu_custom_call.1} parent=1 // pred_fallthru
      _
    // Predicated region
    $region34: #{tpu_custom_call.1} parent=1 // pred_check
      _
    $region35: #{tpu_custom_call.1} parent=1 // pred_check_branch
      %133 = sbr.rel (0) target = $region37
    $region36: #{tpu_custom_call.1} parent=1 // pred_region
      %135 = dma.done [#allocation7], 256
    $region37: #{tpu_custom_call.1} parent=1 // pred_fallthru
      _
    %136 = vsyncpa [#allocation6], 1
    %137 = vsyncpa [#allocation9], 1
    %138 = vsyncpa [#allocation7], 1

</llo_original>
